<compile_context>
chip_gen: v7x
topology: tpu7x:2x2x1
jax: 0.10.0
libtpu: 0.0.40
codegen_flags: <defaults>
</compile_context>

<pallas_src>
import functools

import jax
import jax.numpy as jnp
from jax import lax
from jax.experimental import pallas as pl
from jax.experimental.pallas import tpu as pltpu

EPS = 1e-6
LANES = 128            # vreg lane width
ACC_ROWS = 32          # accumulator rows (4 f32 vregs): ILP + multiple of every packing
MAX_TILE_ROWS = 8192   # (8192, 128) f32 block = 4 MiB; 2 inputs x 2 bufs = 16 MiB VMEM


def _sublane_pack(dtype) -> int:
    """Sublane packing of a dtype: 8 rows for 4-byte, 16 for 2-byte, 32 for 1-byte."""
    return {4: 8, 2: 16, 1: 32}.get(jnp.dtype(dtype).itemsize, 8)


def _num_tensorcores() -> int:
    """2 splits only on v7x-class (2 TC/chip) devices; 1 elsewhere.

    TODO(synk): on v7x, verify with xprof that the size-2 "parallel" axis
    actually shards across both TensorCores; if not, switch that axis to
    pltpu.CORE_PARALLEL or an explicit pl.core_map.
    """
    try:
        kind = jax.devices()[0].device_kind.lower()
    except Exception:
        return 1
    return 2 if "v7" in kind else 1


def _sumsq_kernel(yhat_ref, y_ref, out_ref, *, blocks_per_split, valid_rows,
                  first_masked_block, needs_mask):
    """Accumulate sum((yhat - y)^2) of this row-block into a (32,128) partial-sum block."""
    c = pl.program_id(0)   # split (TensorCore) index
    j = pl.program_id(1)   # row-block index within the split

    @pl.when(j == 0)
    def _():
        out_ref[...] = jnp.zeros_like(out_ref)

    def accumulate(mask_rows):
        d = yhat_ref[...].astype(jnp.float32) - y_ref[...].astype(jnp.float32)
        sq = d * d
        tm = sq.shape[0]
        if mask_rows:
            # Zero rows past the end of the slab (partial last block / duplicated
            # clamped blocks of an uneven split).
            g = c * blocks_per_split + j                       # global row-block index
            row_ids = g * tm + lax.broadcasted_iota(jnp.int32, sq.shape, 0)
            sq = jnp.where(row_ids < valid_rows, sq, jnp.float32(0.0))
        # Reduce only along the leading (vreg-group) axis: pure VPU adds into
        # four independent accumulator vregs.  The single cross-lane reduce,
        # the exact divide by the static n, and the sqrt live in the wrapper.
        out_ref[...] += sq.reshape(tm // ACC_ROWS, ACC_ROWS, LANES).sum(axis=0)

    if needs_mask:
        g = c * blocks_per_split + j
        # Steady-state blocks take the unmasked path: no iota/compare/where VALU work.
        @pl.when(g < first_masked_block)
        def _():
            accumulate(False)

        @pl.when(g >= first_masked_block)
        def _():
            accumulate(True)
    else:
        accumulate(False)


def rmse_loss(yhat, y, eps=EPS, *, max_tile_rows=MAX_TILE_ROWS):
    assert yhat.shape == y.shape, "yhat and y must have the same shape"
    n = yhat.size                      # true element count (static at trace time)
    assert n > 0
    assert n < 2**31, "row indices are computed in int32 inside the kernel"

    pack = max(_sublane_pack(yhat.dtype), _sublane_pack(y.dtype))
    assert ACC_ROWS % pack == 0
    assert max_tile_rows % ACC_ROWS == 0

    yhat_f = yhat.reshape(-1)
    y_f = y.reshape(-1)

    # Lane alignment: the (rows, 128) reinterpretation needs n % 128 == 0.
    # TODO(synk): for large inputs with n % 128 != 0 this pad is a full HBM
    # copy; an element-granular manual-DMA tail path would remove it.
    if n % LANES != 0:
        pad = LANES - n % LANES
        yhat_f = jnp.pad(yhat_f, (0, pad))
        y_f = jnp.pad(y_f, (0, pad))
    rows = yhat_f.size // LANES

    num_splits = _num_tensorcores()

    if rows <= max_tile_rows:
        # Single-block path: tiny pad up to the accumulator granularity so the
        # block needs no in-kernel mask (array is small; copy negligible).
        rows_pad = ((rows + ACC_ROWS - 1) // ACC_ROWS) * ACC_ROWS
        if rows_pad != rows:
            extra = (rows_pad - rows) * LANES
            yhat_f = jnp.pad(yhat_f, (0, extra))
            y_f = jnp.pad(y_f, (0, extra))
            rows = rows_pad
        tile_rows = rows
    else:
        # Multi-block path: NO full-array pad — the partial last block is
        # masked in-kernel instead.
        tile_rows = max_tile_rows

    phys_rows = rows                               # physically present rows
    yhat_2d = yhat_f.reshape(phys_rows, LANES)
    y_2d = y_f.reshape(phys_rows, LANES)

    num_blocks = (phys_rows + tile_rows - 1) // tile_rows
    blocks_per_split = (num_blocks + num_splits - 1) // num_splits
    grid_positions = num_splits * blocks_per_split
    needs_mask = grid_positions * tile_rows > phys_rows
    first_masked_block = phys_rows // tile_rows    # first grid position with invalid rows

    def in_index_map(c, j):
        # Clamp so out-of-range trailing positions re-read a valid block
        # (their contribution is zeroed by the in-kernel mask).
        return (jnp.minimum(c * blocks_per_split + j, num_blocks - 1), 0)

    in_spec = pl.BlockSpec((tile_rows, LANES), in_index_map)
    out_spec = pl.BlockSpec((ACC_ROWS, LANES), lambda c, j: (c, 0))

    block_bytes = tile_rows * LANES * (jnp.dtype(yhat.dtype).itemsize
                                       + jnp.dtype(y.dtype).itemsize)
    # 2 pipeline buffers per input + small output/accumulator blocks + slack.
    vmem_limit = int(max(32 * 1024 * 1024, 2 * block_bytes + (4 << 20)))

    partials = pl.pallas_call(
        functools.partial(_sumsq_kernel,
                          blocks_per_split=blocks_per_split,
                          valid_rows=phys_rows,
                          first_masked_block=first_masked_block,
                          needs_mask=needs_mask),
        out_shape=jax.ShapeDtypeStruct((num_splits * ACC_ROWS, LANES), jnp.float32),
        grid_spec=pltpu.PrefetchScalarGridSpec(
            num_scalar_prefetch=0,
            grid=(num_splits, blocks_per_split),
            in_specs=[in_spec, in_spec],
            out_specs=out_spec,
        ),
        compiler_params=pltpu.CompilerParams(
            dimension_semantics=("parallel", "arbitrary"),
            vmem_limit_bytes=vmem_limit,
        ),
    )(yhat_2d, y_2d)

    # Tiny epilogue: one cross-lane reduce, exact divide by the static n, sqrt.
    total = jnp.sum(partials)
    return jnp.sqrt(total / n + eps)


def _reference(yhat, y, eps=EPS):
    d = yhat.astype(jnp.float32) - y.astype(jnp.float32)
    return jnp.sqrt(jnp.mean(d * d) + eps)


def _check(shape, key, rtol, dtype=jnp.float32, **kwargs):
    k1, k2 = jax.random.split(key)
    yhat = jax.random.normal(k1, shape, dtype=dtype)
    y = jax.random.normal(k2, shape, dtype=dtype)
    loss = rmse_loss(yhat, y, **kwargs)
    jax.block_until_ready(loss)
    ref = _reference(yhat, y)
    assert jnp.allclose(loss, ref, rtol=rtol, atol=1e-6), (shape, float(loss), float(ref))


if __name__ == "__main__":
    key = jax.random.PRNGKey(0)
    k0, k1, k2, k3 = jax.random.split(key, 4)
    # Primary small NCHW-like shape (lane-aligned, single block, no pad/mask).
    _check((2, 4, 16, 16), k0, rtol=1e-5)
    # Unaligned element count (702) -> exercises the small lane-pad path.
    _check((2, 3, 9, 13), k1, rtol=1e-5)
    # Lane-aligned but not a block multiple -> exercises the single-block
    # granularity pad (rows=2304 -> one full-dim block).
    _check((4, 8, 96, 96), k2, rtol=1e-4)
    # Same data but forced through the multi-block path (small max_tile_rows)
    # -> exercises the partial-last-block in-kernel mask + accumulation.
    _check((4, 8, 96, 96), k3, rtol=1e-4, max_tile_rows=256)
    print("KERNEL_OK")
</pallas_src>

<mosaic_0001>
module attributes {stable_mosaic.version = 11 : i64} {
  func.func @_sumsq_kernel(%arg0: i32, %arg1: i32, %arg2: memref<32x128xf32, #tpu.memory_space<vmem>>, %arg3: memref<32x128xf32, #tpu.memory_space<vmem>>, %arg4: memref<32x128xf32, #tpu.memory_space<vmem>>) attributes {dimension_semantics = [#tpu.dimension_semantics<parallel>, #tpu.dimension_semantics<arbitrary>], iteration_bounds = array<i64: 1, 1>, scalar_prefetch = 0 : i64, scratch_operands = 0 : i64, tpu.core_type = #tpu.core_type<tc>, window_params = [{transform_indices = @transform_0, window_bounds = array<i64: 32, 128>}, {transform_indices = @transform_1, window_bounds = array<i64: 32, 128>}, {transform_indices = @transform_2, window_bounds = array<i64: 32, 128>}]} {
    %c0_i32 = arith.constant 0 : i32
    %0 = arith.cmpi eq, %arg1, %c0_i32 : i32
    %1 = arith.extui %0 : i1 to i32
    %c0_i32_0 = arith.constant 0 : i32
    %2 = arith.cmpi ne, %1, %c0_i32_0 : i32
    scf.if %2 {
      %cst_8 = arith.constant 0.000000e+00 : f32
      %12 = vector.broadcast %cst_8 : f32 to vector<32x128xf32>
      %c0_9 = arith.constant 0 : index
      %c0_10 = arith.constant 0 : index
      %13 = vector.load %arg4[%c0_9, %c0_10] : memref<32x128xf32, #tpu.memory_space<vmem>>, vector<32x128xf32>
      tpu.vector_store %arg4[%c0_9, %c0_10], %12 {strides = array<i32>} : memref<32x128xf32, #tpu.memory_space<vmem>>, vector<32x128xf32>,
    } else {
    }
    %c0 = arith.constant 0 : index
    %c0_1 = arith.constant 0 : index
    %3 = vector.load %arg2[%c0, %c0_1] : memref<32x128xf32, #tpu.memory_space<vmem>>, vector<32x128xf32>
    %c0_2 = arith.constant 0 : index
    %c0_3 = arith.constant 0 : index
    %4 = vector.load %arg3[%c0_2, %c0_3] : memref<32x128xf32, #tpu.memory_space<vmem>>, vector<32x128xf32>
    %5 = arith.subf %3, %4 : vector<32x128xf32>
    %6 = arith.mulf %5, %5 : vector<32x128xf32>
    %c0_4 = arith.constant 0 : index
    %c0_5 = arith.constant 0 : index
    %7 = vector.load %arg4[%c0_4, %c0_5] : memref<32x128xf32, #tpu.memory_space<vmem>>, vector<32x128xf32>
    %8 = vector.shape_cast %6 : vector<32x128xf32> to vector<1x32x128xf32>
    %cst = arith.constant dense<0.000000e+00> : vector<32x128xf32>
    %9 = vector.multi_reduction <add>, %8, %cst [0] : vector<1x32x128xf32> to vector<32x128xf32>
    %10 = arith.addf %7, %9 : vector<32x128xf32>
    %c0_6 = arith.constant 0 : index
    %c0_7 = arith.constant 0 : index
    %11 = vector.load %arg4[%c0_6, %c0_7] : memref<32x128xf32, #tpu.memory_space<vmem>>, vector<32x128xf32>
    tpu.vector_store %arg4[%c0_6, %c0_7], %10 {strides = array<i32>} : memref<32x128xf32, #tpu.memory_space<vmem>>, vector<32x128xf32>,
    return
  }
  func.func @transform_0(%arg0: i32, %arg1: i32) -> (i32, i32) {
    %c1_i32 = arith.constant 1 : i32
    %0 = arith.muli %arg0, %c1_i32 : i32
    %1 = arith.addi %0, %arg1 : i32
    %c0_i32 = arith.constant 0 : i32
    %2 = arith.minsi %1, %c0_i32 : i32
    %c0_i32_0 = arith.constant 0 : i32
    %c0_i32_1 = arith.constant 0 : i32
    return %2, %c0_i32_0 : i32, i32
  }
  func.func @transform_1(%arg0: i32, %arg1: i32) -> (i32, i32) {
    %c1_i32 = arith.constant 1 : i32
    %0 = arith.muli %arg0, %c1_i32 : i32
    %1 = arith.addi %0, %arg1 : i32
    %c0_i32 = arith.constant 0 : i32
    %2 = arith.minsi %1, %c0_i32 : i32
    %c0_i32_0 = arith.constant 0 : i32
    %c0_i32_1 = arith.constant 0 : i32
    return %2, %c0_i32_0 : i32, i32
  }
  func.func @transform_2(%arg0: i32, %arg1: i32) -> (i32, i32) {
    %c0_i32 = arith.constant 0 : i32
    %c0_i32_0 = arith.constant 0 : i32
    return %arg0, %c0_i32 : i32, i32
  }
}

</mosaic_0001>

<llo_original>
// kernel: tpu_custom_call.1
$region0: #{tpu_custom_call.1}
  #allocation0 [shape = 'u32[]', space=smem, size = 0x4, offset = 0x4, fixed_abs, tag = 'smem constant byte address 0x4 - core index']
  #allocation1 [shape = 'u32[144,128]{1,0:T(1,128)}', space=vmem, size = 0x12000, scoped, tag = 'internal scratch']
  %s0 = inlined_call_operand.hbm [shape: f32[32,128], index: 0, kind: input, shape index: {}]
  %s1 = inlined_call_operand.hbm [shape: f32[32,128], index: 1, kind: input, shape index: {}]
  %s2 = inlined_call_operand.hbm [shape: f32[32,128], index: 2, kind: output, shape index: {}]
  %s3 = sld [smem:[#allocation0]]
  $region30: #{tpu_custom_call.1} parent=0
    _
  %s5 = ssub.s32 1, %s3
  %s6 = scalar_select 0, %s5, %s3
  $region1: #{tpu_custom_call.1} parent=0
    #allocation2 [shape = 'u8[16384]{0}', space=vmem, size = 0x4000, scoped, tag = 'input window, operand 0, single buffered']
    #allocation3 [shape = 's32[1]{0}', space=sflag, size = 0x4, scoped, tag = 'scoped memory for tpu_custom_call.1']
    #allocation4 [shape = 's32[1]{0}', space=sflag, size = 0x4, scoped, tag = 'scoped memory for tpu_custom_call.1']
    #allocation5 [shape = 'u8[16384]{0}', space=vmem, size = 0x4000, scoped, tag = 'input window, operand 1, single buffered']
    #allocation6 [shape = 's32[1]{0}', space=sflag, size = 0x4, scoped, tag = 'scoped memory for tpu_custom_call.1']
    #allocation7 [shape = 'u8[16384]{0}', space=vmem, size = 0x4000, scoped, tag = 'output window, operand 0, single buffered']
    %7 = vsyncpa [#allocation3], 0
    %8 = vsyncpa [#allocation6], 0
    %9 = vsyncpa [#allocation4], 0
    // Predicated region
    $region2: #{tpu_custom_call.1} parent=1 // pred_check
      _
    $region3: #{tpu_custom_call.1} parent=1 // pred_check_branch
      %11 = sbr.rel (0) target = $region5
    $region4: #{tpu_custom_call.1} parent=1 // pred_region
      %s12 = sadd.s32 0, 0
      %p13 = scmp.lt.s32.totalorder %s12, 0
      %s14 = scalar_select %p13, %s12, 0
      %s15 = smul.u32 4, %s14
      %s17 = ssub.s32 512, 512
      %18 = vsyncadd [#allocation3], %s17
      %s19 = smul.addr %s15, 128
      %s20 = scalar_lea.hbm %s0, %s19
      %s21 = sshll.u32 [#allocation2], 4
      %s22 = int_to_ptr.vmem [resolvable:$true] %s21
      %27 = dma.hbm_to_vmem [thread:$0]  %s20, 512, %s22, [#allocation3], 128, 128, 8
    $region5: #{tpu_custom_call.1} parent=1 // pred_fallthru
      _
    // Predicated region
    $region6: #{tpu_custom_call.1} parent=1 // pred_check
      _
    $region7: #{tpu_custom_call.1} parent=1 // pred_check_branch
      %29 = sbr.rel (0) target = $region9
    $region8: #{tpu_custom_call.1} parent=1 // pred_region
      %s30 = sadd.s32 0, 0
      %p31 = scmp.lt.s32.totalorder %s30, 0
      %s32 = scalar_select %p31, %s30, 0
      %s33 = smul.u32 4, %s32
      %s35 = ssub.s32 512, 512
      %36 = vsyncadd [#allocation6], %s35
      %s37 = smul.addr %s33, 128
      %s38 = scalar_lea.hbm %s1, %s37
      %s39 = sshll.u32 [#allocation5], 4
      %s40 = int_to_ptr.vmem [resolvable:$true] %s39
      %45 = dma.hbm_to_vmem [thread:$0]  %s38, 512, %s40, [#allocation6], 128, 128, 8
    $region9: #{tpu_custom_call.1} parent=1 // pred_fallthru
      _
    // Predicated region
    $region10: #{tpu_custom_call.1} parent=1 // pred_check
      _
    $region11: #{tpu_custom_call.1} parent=1 // pred_check_branch
      %47 = sbr.rel (0) target = $region13
    $region12: #{tpu_custom_call.1} parent=1 // pred_region
      %48 = dma.done [#allocation3], 512
    $region13: #{tpu_custom_call.1} parent=1 // pred_fallthru
      _
    // Predicated region
    $region14: #{tpu_custom_call.1} parent=1 // pred_check
      _
    $region15: #{tpu_custom_call.1} parent=1 // pred_check_branch
      %50 = sbr.rel (0) target = $region17
    $region16: #{tpu_custom_call.1} parent=1 // pred_region
      %51 = dma.done [#allocation6], 512
    $region17: #{tpu_custom_call.1} parent=1 // pred_fallthru
      _
    %s52 = sadd.s32 0, 0
    %p53 = scmp.lt.s32.totalorder %s52, 0
    %s54 = scalar_select %p53, %s52, 0
    %s55 = smul.u32 4, %s54
    %s56 = sadd.s32 0, 0
    %p57 = scmp.lt.s32.totalorder %s56, 0
    %s58 = scalar_select %p57, %s56, 0
    %s59 = smul.u32 4, %s58
    %p60 = scmp.eq.s32.totalorder 0, 0
    // Predicated region
    $region18: #{tpu_custom_call.1} parent=1 // pred_check
      %p61 = pneg %p60
    $region19: #{tpu_custom_call.1} parent=1 // pred_check_branch
      %63 = sbr.rel (%p61) target = $region21
    $region20: #{tpu_custom_call.1} parent=1 // pred_region
      %64 = vst [vmem:[#allocation7] sm:$0xff] 0.0
      %65 = vst [vmem:[#allocation7 + $0x8] sm:$0xff] 0.0
      %66 = vst [vmem:[#allocation7 + $0x10] sm:$0xff] 0.0
      %67 = vst [vmem:[#allocation7 + $0x18] sm:$0xff] 0.0
    $region21: #{tpu_custom_call.1} parent=1 // pred_fallthru
      _
    %v68 = vld [vmem:[#allocation2] sm:$0xff]
    %v69 = vld [vmem:[#allocation2 + $0x8] sm:$0xff]
    %v70 = vld [vmem:[#allocation2 + $0x10] sm:$0xff]
    %v71 = vld [vmem:[#allocation2 + $0x18] sm:$0xff]
    %v72 = vld [vmem:[#allocation5] sm:$0xff]
    %v73 = vld [vmem:[#allocation5 + $0x8] sm:$0xff]
    %v74 = vld [vmem:[#allocation5 + $0x10] sm:$0xff]
    %v75 = vld [vmem:[#allocation5 + $0x18] sm:$0xff]
    %v76 = vsub.f32 %v68, %v72
    %v77 = vsub.f32 %v69, %v73
    %v78 = vsub.f32 %v70, %v74
    %v79 = vsub.f32 %v71, %v75
    %v80 = vmul.f32 %v76, %v76
    %v81 = vmul.f32 %v77, %v77
    %v82 = vmul.f32 %v78, %v78
    %v83 = vmul.f32 %v79, %v79
    %v84 = vld [vmem:[#allocation7] sm:$0xff]
    %v85 = vld [vmem:[#allocation7 + $0x8] sm:$0xff]
    %v86 = vld [vmem:[#allocation7 + $0x10] sm:$0xff]
    %v87 = vld [vmem:[#allocation7 + $0x18] sm:$0xff]
    %v88 = vadd.f32 %v80, 0.0
    %v89 = vadd.f32 %v81, 0.0
    %v90 = vadd.f32 %v82, 0.0
    %v91 = vadd.f32 %v83, 0.0
    %v92 = vadd.f32 %v84, %v88
    %v93 = vadd.f32 %v85, %v89
    %v94 = vadd.f32 %v86, %v90
    %v95 = vadd.f32 %v87, %v91
    %96 = vst [vmem:[#allocation7] sm:$0xff] %v92
    %97 = vst [vmem:[#allocation7 + $0x8] sm:$0xff] %v93
    %98 = vst [vmem:[#allocation7 + $0x10] sm:$0xff] %v94
    %99 = vst [vmem:[#allocation7 + $0x18] sm:$0xff] %v95
    // Predicated region
    $region22: #{tpu_custom_call.1} parent=1 // pred_check
      _
    $region23: #{tpu_custom_call.1} parent=1 // pred_check_branch
      %101 = sbr.rel (0) target = $region25
    $region24: #{tpu_custom_call.1} parent=1 // pred_region
      %s103 = ssub.s32 512, 512
      %104 = vsyncadd [#allocation4], %s103
      %s105 = sshll.u32 [#allocation7], 4
      %s106 = int_to_ptr.vmem [resolvable:$true] %s105
      %111 = dma.vmem_to_hbm [thread:$0]  %s106, 512, %s2, [#allocation4], 128, 128, 8
    $region25: #{tpu_custom_call.1} parent=1 // pred_fallthru
      _
    // Predicated region
    $region26: #{tpu_custom_call.1} parent=1 // pred_check
      _
    $region27: #{tpu_custom_call.1} parent=1 // pred_check_branch
      %113 = sbr.rel (0) target = $region29
    $region28: #{tpu_custom_call.1} parent=1 // pred_region
      %114 = dma.done [#allocation4], 512
    $region29: #{tpu_custom_call.1} parent=1 // pred_fallthru
      _
    %115 = vsyncpa [#allocation3], 1
    %116 = vsyncpa [#allocation6], 1
    %117 = vsyncpa [#allocation4], 1

</llo_original>
